<compile_context>
chip_gen: v5e
topology: v5e:2x2
jax: 0.10.0
libtpu: 0.0.40
codegen_flags: <defaults>
</compile_context>

<pallas_src>
import functools
import math

import jax
import jax.numpy as jnp
from jax.experimental import pallas as pl
from jax.experimental.pallas import tpu as pltpu

_LOG_2PI = math.log(2.0 * math.pi)

# Per pipeline-buffer budget for one z tile.  2x (double buffering) of this
# stays inside v5e's 16 MiB scoped-VMEM default and far inside v7x's 64 MiB
# physical VMEM.  (v6e could go bigger, but this is safe everywhere.)
_PER_BUFFER_BYTES = 6 * 1024 * 1024


def _pick_tiles(batch, z_dim, itemsize, per_buffer_bytes):
    """Pick (tb, tz) tile sizes for the z block.

    Legality constraints:
      * z block (tb, tz): tb % 8 == 0 or tb == batch ; tz % 128 == 0 or tz == z_dim
      * ldj block (1, tb): tb % 128 == 0 or tb == batch
      => tb is either == batch (full extent) or a multiple of 128.
    VMEM constraint: tb * tz * itemsize <= per_buffer_bytes.
    """
    if batch * z_dim * itemsize <= per_buffer_bytes:
        return batch, z_dim  # single full-extent block

    # Tile the feature dim only if a 128-row slab of the full feature dim is
    # already over budget (very wide Z).
    tz = z_dim
    if 128 * z_dim * itemsize > per_buffer_bytes:
        tz = (per_buffer_bytes // (128 * itemsize)) // 128 * 128
        tz = int(min(max(tz, 128), z_dim))

    rows = per_buffer_bytes // max(1, tz * itemsize)
    rows = max(128, (rows // 128) * 128)  # 128 = lcm(8 sublane, 128 lane)
    rows = int(min(rows, batch))          # rows == batch => full extent (legal)
    return rows, tz


def _loss_kernel(z_ref, ldj_ref, out_ref, *, batch, z_dim, tb, tz, nbp):
    # z_ref: (tb, tz) native dtype ; ldj_ref: (1, tb) native dtype
    # out_ref: (1, 8, 128) f32, resident across the two "arbitrary" axes.
    p = pl.program_id(0)  # TensorCore split ("parallel")
    i = pl.program_id(1)  # batch tile     ("arbitrary")
    j = pl.program_id(2)  # feature tile   ("arbitrary")

    @pl.when(jnp.logical_and(i == 0, j == 0))
    def _init():
        out_ref[...] = jnp.zeros_like(out_ref)

    row_start = (p * nbp + i) * tb
    col_start = j * tz

    # Mask out-of-range rows/cols of partial (or clamp-duplicated) tiles in
    # the kernel instead of padding in the wrapper: a VPU compare+select that
    # hides under the DMA.
    z = z_ref[...].astype(jnp.float32)
    row_ids = row_start + jax.lax.broadcasted_iota(jnp.int32, (tb, tz), 0)
    col_ids = col_start + jax.lax.broadcasted_iota(jnp.int32, (tb, tz), 1)
    valid = jnp.logical_and(row_ids < batch, col_ids < z_dim)
    z = jnp.where(valid, z, 0.0)
    out_ref[...] += (-0.5) * jnp.sum(z * z)

    # Fold the lane-dense log-det-jacobian in once per batch tile.
    @pl.when(j == 0)
    def _ldj():
        ldj = ldj_ref[...].astype(jnp.float32)
        lane_ids = row_start + jax.lax.broadcasted_iota(jnp.int32, (1, tb), 1)
        ldj = jnp.where(lane_ids < batch, ldj, 0.0)
        out_ref[...] += jnp.sum(ldj)


def nf_loss(z, log_det_jacobian, *, per_buffer_bytes=_PER_BUFFER_BYTES):
    """z: (B, Z), log_det_jacobian: (B,) -> scalar float32 loss."""
    B, Z = z.shape
    ldj = log_det_jacobian.reshape(1, B)  # lane-dense layout

    tb, tz = _pick_tiles(B, Z, z.dtype.itemsize, per_buffer_bytes)
    total_b_tiles = pl.cdiv(B, tb)
    n_z = pl.cdiv(Z, tz)

    # Size-2 leading "parallel" axis: splits batch tiles across v7x's two
    # TensorCores; runs sequentially (neutral) on single-TC v5e/v6e.
    n_par = 2 if total_b_tiles >= 2 else 1
    nbp = pl.cdiv(total_b_tiles, n_par)

    def b_index(p, i):
        # Clamp so no block start is entirely past the array; duplicated tiles
        # contribute zero because the in-kernel mask uses the *logical* offset.
        return jnp.minimum(p * nbp + i, total_b_tiles - 1)

    kernel = functools.partial(
        _loss_kernel, batch=B, z_dim=Z, tb=tb, tz=tz, nbp=nbp
    )

    cost = pl.CostEstimate(
        flops=2 * B * Z,
        transcendentals=0,
        bytes_accessed=B * Z * z.dtype.itemsize
        + B * log_det_jacobian.dtype.itemsize
        + n_par * 8 * 128 * 4,
    )

    partials = pl.pallas_call(
        kernel,
        out_shape=jax.ShapeDtypeStruct((n_par, 8, 128), jnp.float32),
        grid=(n_par, nbp, n_z),
        in_specs=[
            pl.BlockSpec((tb, tz), lambda p, i, j: (b_index(p, i), j)),
            pl.BlockSpec((1, tb), lambda p, i, j: (0, b_index(p, i))),
        ],
        out_specs=pl.BlockSpec((1, 8, 128), lambda p, i, j: (p, 0, 0)),
        compiler_params=pltpu.CompilerParams(
            dimension_semantics=("parallel", "arbitrary", "arbitrary")
        ),
        cost_estimate=cost,
    )(z, ldj)

    # Scalar epilogue in the wrapper: per-core partial sum -> total, constant
    # normalizer, negate, 1/B (all with the true B).
    total = jnp.sum(partials[:, 0, 0])
    return -(total - 0.5 * B * Z * _LOG_2PI) / B


def reference_loss(z, log_det_jacobian):
    z = z.astype(jnp.float32)
    ldj = log_det_jacobian.astype(jnp.float32)
    z_dim = z.shape[-1]
    log_prob = -0.5 * jnp.sum(z * z, axis=-1) - 0.5 * z_dim * _LOG_2PI
    return -jnp.mean(log_prob + ldj)


if __name__ == "__main__":
    key = jax.random.PRNGKey(0)
    k1, k2, k3, k4, k5, k6 = jax.random.split(key, 6)

    # 1) Small case matching the module (single full-extent block).
    B, Z_DIM = 8, 32
    z = jax.random.normal(k1, (B, Z_DIM), dtype=jnp.float32)
    ldj = jax.random.normal(k2, (B,), dtype=jnp.float32)
    loss = jax.block_until_ready(nf_loss(z, ldj))
    ref = jax.block_until_ready(reference_loss(z, ldj))
    assert jnp.allclose(loss, ref, rtol=1e-5, atol=1e-5), (loss, ref)

    # 2) Non-divisible batch, forced batch tiling + 2-way core split + in-kernel
    #    row masking (tiny budget just to exercise the tiled path at small size).
    B2, Z2 = 1300, 256
    z2 = jax.random.normal(k3, (B2, Z2), dtype=jnp.float32)
    ldj2 = jax.random.normal(k4, (B2,), dtype=jnp.float32)
    loss2 = jax.block_until_ready(
        nf_loss(z2, ldj2, per_buffer_bytes=128 * 256 * 4)
    )
    ref2 = jax.block_until_ready(reference_loss(z2, ldj2))
    assert jnp.allclose(loss2, ref2, rtol=1e-4, atol=1e-4), (loss2, ref2)

    # 3) Forced feature (Z) tiling path + column masking + bf16 input.
    B3, Z3 = 300, 512
    z3 = jax.random.normal(k5, (B3, Z3), dtype=jnp.bfloat16)
    ldj3 = jax.random.normal(k6, (B3,), dtype=jnp.bfloat16)
    loss3 = jax.block_until_ready(
        nf_loss(z3, ldj3, per_buffer_bytes=128 * 128 * 4)
    )
    ref3 = jax.block_until_ready(reference_loss(z3, ldj3))
    assert jnp.allclose(loss3, ref3, rtol=1e-3, atol=1e-3), (loss3, ref3)

    print("KERNEL_OK")
</pallas_src>

<mosaic_0001>
module attributes {stable_mosaic.version = 11 : i64} {
  func.func @_loss_kernel(%arg0: i32, %arg1: i32, %arg2: i32, %arg3: memref<8x32xf32, #tpu.memory_space<vmem>>, %arg4: memref<1x8xf32, #tpu.memory_space<vmem>>, %arg5: memref<1x8x128xf32, #tpu.memory_space<vmem>>) attributes {dimension_semantics = [#tpu.dimension_semantics<parallel>, #tpu.dimension_semantics<arbitrary>, #tpu.dimension_semantics<arbitrary>], iteration_bounds = array<i64: 1, 1, 1>, scalar_prefetch = 0 : i64, scratch_operands = 0 : i64, tpu.core_type = #tpu.core_type<tc>, window_params = [{transform_indices = @transform_0, window_bounds = array<i64: 8, 32>}, {transform_indices = @transform_1, window_bounds = array<i64: 1, 8>}, {transform_indices = @transform_2, window_bounds = array<i64: 1, 8, 128>}]} {
    %c0_i32 = arith.constant 0 : i32
    %0 = arith.cmpi eq, %arg1, %c0_i32 : i32
    %c0_i32_0 = arith.constant 0 : i32
    %1 = arith.cmpi eq, %arg2, %c0_i32_0 : i32
    %2 = arith.andi %0, %1 : i1
    %3 = arith.extui %2 : i1 to i32
    %c0_i32_1 = arith.constant 0 : i32
    %4 = arith.cmpi ne, %3, %c0_i32_1 : i32
    scf.if %4 {
      %cst_15 = arith.constant 0.000000e+00 : f32
      %36 = vector.broadcast %cst_15 : f32 to vector<1x8x128xf32>
      %c0_16 = arith.constant 0 : index
      %c0_17 = arith.constant 0 : index
      %c0_18 = arith.constant 0 : index
      %37 = vector.load %arg5[%c0_16, %c0_17, %c0_18] : memref<1x8x128xf32, #tpu.memory_space<vmem>>, vector<1x8x128xf32>
      tpu.vector_store %arg5[%c0_16, %c0_17, %c0_18], %36 {strides = array<i32>} : memref<1x8x128xf32, #tpu.memory_space<vmem>>, vector<1x8x128xf32>,
    } else {
    }
    %c1_i32 = arith.constant 1 : i32
    %5 = arith.muli %arg0, %c1_i32 : i32
    %6 = arith.addi %5, %arg1 : i32
    %c8_i32 = arith.constant 8 : i32
    %7 = arith.muli %6, %c8_i32 : i32
    %c32_i32 = arith.constant 32 : i32
    %8 = arith.muli %arg2, %c32_i32 : i32
    %c0 = arith.constant 0 : index
    %c0_2 = arith.constant 0 : index
    %9 = vector.load %arg3[%c0, %c0_2] : memref<8x32xf32, #tpu.memory_space<vmem>>, vector<8x32xf32>
    %10 = tpu.iota {dimensions = array<i32: 0>} : vector<8x32xi32>
    %11 = vector.broadcast %7 : i32 to vector<8x32xi32>
    %12 = arith.addi %11, %10 : vector<8x32xi32>
    %13 = tpu.iota {dimensions = array<i32: 1>} : vector<8x32xi32>
    %14 = vector.broadcast %8 : i32 to vector<8x32xi32>
    %15 = arith.addi %14, %13 : vector<8x32xi32>
    %c8_i32_3 = arith.constant 8 : i32
    %16 = vector.broadcast %c8_i32_3 : i32 to vector<8x32xi32>
    %17 = arith.cmpi slt, %12, %16 : vector<8x32xi32>
    %c32_i32_4 = arith.constant 32 : i32
    %18 = vector.broadcast %c32_i32_4 : i32 to vector<8x32xi32>
    %19 = arith.cmpi slt, %15, %18 : vector<8x32xi32>
    %20 = arith.andi %17, %19 : vector<8x32xi1>
    %cst = arith.constant 0.000000e+00 : f32
    %21 = vector.broadcast %cst : f32 to vector<8x32xf32>
    %22 = arith.select %20, %9, %21 : vector<8x32xi1>, vector<8x32xf32>
    %c0_5 = arith.constant 0 : index
    %c0_6 = arith.constant 0 : index
    %c0_7 = arith.constant 0 : index
    %23 = vector.load %arg5[%c0_5, %c0_6, %c0_7] : memref<1x8x128xf32, #tpu.memory_space<vmem>>, vector<1x8x128xf32>
    %24 = arith.mulf %22, %22 : vector<8x32xf32>
    %25 = vector.shape_cast %24 : vector<8x32xf32> to vector<1x8x32xf32>
    %cst_8 = arith.constant dense<0.000000e+00> : vector<1xf32>
    %26 = vector.multi_reduction <add>, %25, %cst_8 [1, 2] : vector<1x8x32xf32> to vector<1xf32>
    %27 = vector.shape_cast %26 : vector<1xf32> to vector<1x1x1xf32>
    %28 = vector.extract %27[0, 0, 0] : f32 from vector<1x1x1xf32>
    %cst_9 = arith.constant -5.000000e-01 : f32
    %29 = arith.mulf %cst_9, %28 : f32
    %30 = vector.broadcast %29 : f32 to vector<1x8x128xf32>
    %31 = arith.addf %23, %30 : vector<1x8x128xf32>
    %c0_10 = arith.constant 0 : index
    %c0_11 = arith.constant 0 : index
    %c0_12 = arith.constant 0 : index
    %32 = vector.load %arg5[%c0_10, %c0_11, %c0_12] : memref<1x8x128xf32, #tpu.memory_space<vmem>>, vector<1x8x128xf32>
    tpu.vector_store %arg5[%c0_10, %c0_11, %c0_12], %31 {strides = array<i32>} : memref<1x8x128xf32, #tpu.memory_space<vmem>>, vector<1x8x128xf32>,
    %c0_i32_13 = arith.constant 0 : i32
    %33 = arith.cmpi eq, %arg2, %c0_i32_13 : i32
    %34 = arith.extui %33 : i1 to i32
    %c0_i32_14 = arith.constant 0 : i32
    %35 = arith.cmpi ne, %34, %c0_i32_14 : i32
    scf.if %35 {
      %c0_15 = arith.constant 0 : index
      %c0_16 = arith.constant 0 : index
      %36 = vector.load %arg4[%c0_15, %c0_16] : memref<1x8xf32, #tpu.memory_space<vmem>>, vector<1x8xf32>
      %37 = tpu.iota {dimensions = array<i32: 1>} : vector<1x8xi32>
      %38 = vector.broadcast %7 : i32 to vector<1x8xi32>
      %39 = arith.addi %38, %37 : vector<1x8xi32>
      %c8_i32_17 = arith.constant 8 : i32
      %40 = vector.broadcast %c8_i32_17 : i32 to vector<1x8xi32>
      %41 = arith.cmpi slt, %39, %40 : vector<1x8xi32>
      %cst_18 = arith.constant 0.000000e+00 : f32
      %42 = vector.broadcast %cst_18 : f32 to vector<1x8xf32>
      %43 = arith.select %41, %36, %42 : vector<1x8xi1>, vector<1x8xf32>
      %c0_19 = arith.constant 0 : index
      %c0_20 = arith.constant 0 : index
      %c0_21 = arith.constant 0 : index
      %44 = vector.load %arg5[%c0_19, %c0_20, %c0_21] : memref<1x8x128xf32, #tpu.memory_space<vmem>>, vector<1x8x128xf32>
      %45 = vector.shape_cast %43 : vector<1x8xf32> to vector<1x1x8xf32>
      %cst_22 = arith.constant dense<0.000000e+00> : vector<1xf32>
      %46 = vector.multi_reduction <add>, %45, %cst_22 [1, 2] : vector<1x1x8xf32> to vector<1xf32>
      %47 = vector.shape_cast %46 : vector<1xf32> to vector<1x1x1xf32>
      %48 = vector.extract %47[0, 0, 0] : f32 from vector<1x1x1xf32>
      %49 = vector.broadcast %48 : f32 to vector<1x8x128xf32>
      %50 = arith.addf %44, %49 : vector<1x8x128xf32>
      %c0_23 = arith.constant 0 : index
      %c0_24 = arith.constant 0 : index
      %c0_25 = arith.constant 0 : index
      %51 = vector.load %arg5[%c0_23, %c0_24, %c0_25] : memref<1x8x128xf32, #tpu.memory_space<vmem>>, vector<1x8x128xf32>
      tpu.vector_store %arg5[%c0_23, %c0_24, %c0_25], %50 {strides = array<i32>} : memref<1x8x128xf32, #tpu.memory_space<vmem>>, vector<1x8x128xf32>,
    } else {
    }
    return
  }
  func.func @transform_0(%arg0: i32, %arg1: i32, %arg2: i32) -> (i32, i32) {
    %c1_i32 = arith.constant 1 : i32
    %0 = arith.muli %arg0, %c1_i32 : i32
    %1 = arith.addi %0, %arg1 : i32
    %c0_i32 = arith.constant 0 : i32
    %2 = arith.minsi %1, %c0_i32 : i32
    %c0_i32_0 = arith.constant 0 : i32
    return %2, %arg2 : i32, i32
  }
  func.func @transform_1(%arg0: i32, %arg1: i32, %arg2: i32) -> (i32, i32) {
    %c1_i32 = arith.constant 1 : i32
    %0 = arith.muli %arg0, %c1_i32 : i32
    %1 = arith.addi %0, %arg1 : i32
    %c0_i32 = arith.constant 0 : i32
    %2 = arith.minsi %1, %c0_i32 : i32
    %c0_i32_0 = arith.constant 0 : i32
    %c0_i32_1 = arith.constant 0 : i32
    return %c0_i32_0, %2 : i32, i32
  }
  func.func @transform_2(%arg0: i32, %arg1: i32, %arg2: i32) -> (i32, i32, i32) {
    %c0_i32 = arith.constant 0 : i32
    %c0_i32_0 = arith.constant 0 : i32
    %c0_i32_1 = arith.constant 0 : i32
    return %arg0, %c0_i32, %c0_i32_0 : i32, i32, i32
  }
}

</mosaic_0001>

<llo_original>
// kernel: tpu_custom_call.1
$region0: #{tpu_custom_call.1}
  #allocation0 [shape = 'u32[]', space=smem, size = 0x4, offset = 0x4, fixed_abs, tag = 'smem constant byte address 0x4 - core index']
  #allocation1 [shape = 'u32[72,128]{1,0:T(1,128)}', space=vmem, size = 0x9000, scoped, tag = 'internal scratch']
  %s0 = inlined_call_operand.hbm [shape: f32[8,32], index: 0, kind: input, shape index: {}]
  %s1 = inlined_call_operand.hbm [shape: f32[1,8], index: 1, kind: input, shape index: {}]
  %s2 = inlined_call_operand.hbm [shape: f32[1,8,128], index: 2, kind: output, shape index: {}]
  %s3 = sld [smem:[#allocation0]]
  $region34: #{tpu_custom_call.1} parent=0
    _
  %s5 = ssub.s32 1, %s3
  %s6 = scalar_select 0, %s5, %s3
  $region1: #{tpu_custom_call.1} parent=0
    #allocation2 [shape = 'u8[4096]{0}', space=vmem, size = 0x1000, scoped, tag = 'input window, operand 0, single buffered']
    #allocation3 [shape = 's32[1]{0}', space=sflag, size = 0x4, scoped, tag = 'scoped memory for tpu_custom_call.1']
    #allocation4 [shape = 's32[1]{0}', space=sflag, size = 0x4, scoped, tag = 'scoped memory for tpu_custom_call.1']
    #allocation5 [shape = 'u8[512]{0}', space=vmem, size = 0x400, scoped, tag = 'input window, operand 1, single buffered']
    #allocation6 [shape = 's32[1]{0}', space=sflag, size = 0x4, scoped, tag = 'scoped memory for tpu_custom_call.1']
    #allocation7 [shape = 'u8[4096]{0}', space=vmem, size = 0x1000, scoped, tag = 'output window, operand 0, single buffered']
    %7 = vsyncpa [#allocation3], 0
    %8 = vsyncpa [#allocation6], 0
    %9 = vsyncpa [#allocation4], 0
    // Predicated region
    $region2: #{tpu_custom_call.1} parent=1 // pred_check
      _
    $region3: #{tpu_custom_call.1} parent=1 // pred_check_branch
      %11 = sbr.rel (0) target = $region5
    $region4: #{tpu_custom_call.1} parent=1 // pred_region
      %s12 = sadd.s32 0, 0
      %p13 = scmp.lt.s32.totalorder %s12, 0
      %s14 = scalar_select %p13, %s12, 0
      %16 = vsyncadd [#allocation3], 0
      %s17 = smul.addr %s14, 8
      %s18 = scalar_lea.hbm %s0, %s17
      %s20 = sshll.u32 %s18, 4
      %s21 = int_to_ptr.hbm [resolvable:$true] %s20
      %s22 = sshll.u32 [#allocation2], 4
      %s23 = int_to_ptr.vmem [resolvable:$true] %s22
      %25 = dma.hbm_to_vmem [thread:$0]  %s21, 128, %s23, [#allocation3]
    $region5: #{tpu_custom_call.1} parent=1 // pred_fallthru
      _
    // Predicated region
    $region6: #{tpu_custom_call.1} parent=1 // pred_check
      _
    $region7: #{tpu_custom_call.1} parent=1 // pred_check_branch
      %27 = sbr.rel (0) target = $region9
    $region8: #{tpu_custom_call.1} parent=1 // pred_region
      %s28 = sadd.s32 0, 0
      %p29 = scmp.lt.s32.totalorder %s28, 0
      %s30 = scalar_select %p29, %s28, 0
      %32 = vsyncadd [#allocation6], 0
      %s33 = scalar_lea.hbm %s1, %s30
      %s35 = sshll.u32 %s33, 4
      %s36 = int_to_ptr.hbm [resolvable:$true] %s35
      %s37 = sshll.u32 [#allocation5], 4
      %s38 = int_to_ptr.vmem [resolvable:$true] %s37
      %40 = dma.hbm_to_vmem [thread:$0]  %s36, 16, %s38, [#allocation6]
    $region9: #{tpu_custom_call.1} parent=1 // pred_fallthru
      _
    // Predicated region
    $region10: #{tpu_custom_call.1} parent=1 // pred_check
      _
    $region11: #{tpu_custom_call.1} parent=1 // pred_check_branch
      %42 = sbr.rel (0) target = $region13
    $region12: #{tpu_custom_call.1} parent=1 // pred_region
      %44 = dma.done [#allocation3], 128
    $region13: #{tpu_custom_call.1} parent=1 // pred_fallthru
      _
    // Predicated region
    $region14: #{tpu_custom_call.1} parent=1 // pred_check
      _
    $region15: #{tpu_custom_call.1} parent=1 // pred_check_branch
      %46 = sbr.rel (0) target = $region17
    $region16: #{tpu_custom_call.1} parent=1 // pred_region
      %48 = dma.done [#allocation6], 16
    $region17: #{tpu_custom_call.1} parent=1 // pred_fallthru
      _
    %s49 = sadd.s32 0, 0
    %p50 = scmp.lt.s32.totalorder %s49, 0
    %s51 = scalar_select %p50, %s49, 0
    %s52 = sadd.s32 0, 0
    %p53 = scmp.lt.s32.totalorder %s52, 0
    %s54 = scalar_select %p53, %s52, 0
    %p55 = scmp.eq.s32.totalorder 0, 0
    %p56 = scmp.eq.s32.totalorder 0, 0
    %p57 = pnand %p55, %p56
    %p58 = pneg %p57
    // Predicated region
    $region18: #{tpu_custom_call.1} parent=1 // pred_check
      _
    $region19: #{tpu_custom_call.1} parent=1 // pred_check_branch
      %60 = sbr.rel (%p57) target = $region21
    $region20: #{tpu_custom_call.1} parent=1 // pred_region
      %61 = vst [vmem:[#allocation7] sm:$0xff] 0.0
    $region21: #{tpu_custom_call.1} parent=1 // pred_fallthru
      _
    %s62 = sadd.s32 0, 0
    %s63 = smul.u32 %s62, 8
    %s64 = smul.u32 0, 32
    %v65 = vld [vmem:[#allocation2] sm:$0xff]
    %v66 = vlaneseq
    %v67 = vshrl.u32 %v66, 7
    %v68 = vstv %s63
    %v69 = vadd.s32 %v68, %v67
    %v70 = vlaneseq
    %v71 = vand.u32 %v70, 127
    %v72 = vstv %s64
    %v73 = vadd.s32 %v72, %v71
    %vm74 = vcmp.lt.s32.totalorder %v69, 8
    %vm75 = vcmp.lt.s32.totalorder %v73, 32
    %vm76 = vmand %vm74, %vm75
    %v77 = vsel %vm76, %v65, 0.0
    %v78 = vld [vmem:[#allocation7] sm:$0xff]
    %v79 = vmul.f32 %v77, %v77
    %vm80 = vcmask 261120
    %v81 = vsel %vm80, %v79, 0.0
    %82 = vadd.xlane.f32.xlu0 %v81
    %v83 = vpop.xlane.xlu0 %82
    %v84 = vrot.slane %v83, 4
    %v85 = vadd.f32 %v83, %v84
    %v86 = vrot.slane %v85, 2
    %v87 = vadd.f32 %v85, %v86
    %v88 = vrot.slane %v87, 1
    %v89 = vadd.f32 %v87, %v88
    %s90 = vtos %v89
    %s91 = smul.f32 %s90, -0.5
    %v92 = vstv %s91
    %v93 = vadd.f32 %v78, %v92
    %94 = vst [vmem:[#allocation7] sm:$0xff] %v93
    // Predicated region
    $region22: #{tpu_custom_call.1} parent=1 // pred_check
      %p95 = pneg %p56
    $region23: #{tpu_custom_call.1} parent=1 // pred_check_branch
      %97 = sbr.rel (%p95) target = $region25
    $region24: #{tpu_custom_call.1} parent=1 // pred_region
      %v98 = vld [vmem:[#allocation5] sm:$0x1]
      %v99 = vadd.s32 %v68, %v71
      %vm100 = vcmp.lt.s32.totalorder %v99, 8
      %v101 = vsel %vm100, %v98, 0.0
      %v102 = vld [vmem:[#allocation7] sm:$0xff]
      %vm103 = vcmask 57344
      %v104 = vsel %vm103, %v101, 0.0
      %105 = vadd.xlane.f32.xlu0 %v104
      %v106 = vpop.xlane.xlu0 %105
      %v107 = vrot.slane %v106, 4
      %v108 = vadd.f32 %v106, %v107
      %v109 = vrot.slane %v108, 2
      %v110 = vadd.f32 %v108, %v109
      %v111 = vrot.slane %v110, 1
      %v112 = vadd.f32 %v110, %v111
      %s113 = vtos %v112
      %v114 = vstv %s113
      %v115 = vadd.f32 %v102, %v114
      %116 = vst [vmem:[#allocation7] sm:$0xff] %v115
    $region25: #{tpu_custom_call.1} parent=1 // pred_fallthru
      _
    // Predicated region
    $region26: #{tpu_custom_call.1} parent=1 // pred_check
      _
    $region27: #{tpu_custom_call.1} parent=1 // pred_check_branch
      %118 = sbr.rel (0) target = $region29
    $region28: #{tpu_custom_call.1} parent=1 // pred_region
      %120 = vsyncadd [#allocation4], 0
      %s122 = sshll.u32 [#allocation7], 4
      %s123 = int_to_ptr.vmem [resolvable:$true] %s122
      %s124 = sshll.u32 %s2, 4
      %s125 = int_to_ptr.hbm [resolvable:$true] %s124
      %127 = dma.vmem_to_hbm [thread:$0]  %s123, 128, %s125, [#allocation4]
    $region29: #{tpu_custom_call.1} parent=1 // pred_fallthru
      _
    // Predicated region
    $region30: #{tpu_custom_call.1} parent=1 // pred_check
      _
    $region31: #{tpu_custom_call.1} parent=1 // pred_check_branch
      %129 = sbr.rel (0) target = $region33
    $region32: #{tpu_custom_call.1} parent=1 // pred_region
      %131 = dma.done [#allocation4], 128
    $region33: #{tpu_custom_call.1} parent=1 // pred_fallthru
      _
    %132 = vsyncpa [#allocation3], 1
    %133 = vsyncpa [#allocation6], 1
    %134 = vsyncpa [#allocation4], 1

</llo_original>
